<compile_context>
chip_gen: v7x
topology: tpu7x:2x2x1
jax: 0.10.0
libtpu: 0.0.40
codegen_flags: <defaults>
</compile_context>

<pallas_src>
import functools

import jax
import jax.numpy as jnp
import numpy as np
from jax.experimental import pallas as pl
from jax.experimental.pallas import tpu as pltpu

KSIZE = 3  # SpatialGate(kernel_size=3)
PAD = (KSIZE - 1) // 2


# ---------------------------------------------------------------------------
# Shared in-kernel helpers: 3x3 "same" cross-correlation on flat (..., H*W) planes
# ---------------------------------------------------------------------------

def _build_taps(W, HW, w_idx, flat_idx):
    """Per-tap (weight index, flat roll shift, validity mask (1, HW) or None)."""
    taps = []
    for kh in range(KSIZE):
        for kw in range(KSIZE):
            dh, dw = kh - PAD, kw - PAD
            shift = (-(dh * W + dw)) % HW            # result[f] = z[f + dh*W + dw]
            conds = []
            if dh > 0:
                conds.append(flat_idx < HW - dh * W)   # h + dh <= H-1
            elif dh < 0:
                conds.append(flat_idx >= -dh * W)      # h + dh >= 0
            if dw > 0:
                conds.append(w_idx < W - dw)           # w + dw <= W-1
            elif dw < 0:
                conds.append(w_idx >= -dw)             # w + dw >= 0
            mask = None
            for cnd in conds:
                mask = cnd if mask is None else (mask & cnd)
            taps.append((kh * KSIZE + kw, shift, mask))
    return taps


def _conv3x3(pmax, pmean, wvals, taps):
    """3x3 stride-1 pad-1 conv of the stacked (max, mean) planes, batched over rows."""
    acc = jnp.zeros(pmax.shape, jnp.float32)
    for k, shift, mask in taps:
        pm = pltpu.roll(pmax, shift, 1) if shift else pmax
        pa = pltpu.roll(pmean, shift, 1) if shift else pmean
        contrib = wvals[k] * pm + wvals[KSIZE * KSIZE + k] * pa
        if mask is not None:
            contrib = jnp.where(mask, contrib, 0.0)   # mask (1, HW) broadcasts over rows
        acc = acc + contrib
    return acc


# ---------------------------------------------------------------------------
# Fused single-pass kernel (whole (C, HW) slab per batch row resident in VMEM)
# ---------------------------------------------------------------------------

def spatial_gate_kernel(w_ref, b_ref, widx_ref, x_ref, o_ref, *, W):
    # w_ref   : SMEM (18,) f32   -- conv weights with BN scale folded in, layout [in, kh, kw]
    # b_ref   : SMEM (1,)  f32   -- folded BN bias
    # widx_ref: VMEM (1, HW) i32 -- w coordinate of each flat spatial position
    # x_ref   : VMEM (TB, C, HW) -- channels on sublanes, H*W on lanes
    TB, C, HW = x_ref.shape
    inv_c = 1.0 / C

    # Hoisted scalar parameter reads (Ref reads are not CSE'd across Python loops).
    wvals = [w_ref[k] for k in range(2 * KSIZE * KSIZE)]
    bias = b_ref[0]

    # Edge-mask building blocks for the conv (once per grid step).
    w_idx = widx_ref[...]                                        # (1, HW) int32
    flat_idx = jax.lax.broadcasted_iota(jnp.int32, (1, HW), 1)   # (1, HW) int32
    taps = _build_taps(W, HW, w_idx, flat_idx)

    # ChannelPool for all TB batch rows at once: (TB, HW) f32 planes (fills sublanes).
    pmax = jnp.max(x_ref[...], axis=1).astype(jnp.float32)             # (TB, HW)
    pmean = jnp.sum(x_ref[...], axis=1, dtype=jnp.float32) * inv_c     # (TB, HW)

    # Batched 3x3 conv + folded BN bias + sigmoid; one cast to the gate dtype.
    acc = _conv3x3(pmax, pmean, wvals, taps)                           # (TB, HW) f32
    scale = jax.nn.sigmoid(acc + bias).astype(x_ref.dtype)             # (TB, HW)

    # Gate: exactly one multiply + one store per element, in the input dtype.
    for b in range(TB):  # TB is static
        o_ref[b] = x_ref[b] * scale[b:b + 1]


# ---------------------------------------------------------------------------
# Two-pass channel-tiled fallback (for per-batch slabs too large for the fused path)
# ---------------------------------------------------------------------------

def spatial_scale_kernel(w_ref, b_ref, widx_ref, x_ref, s_ref, pmax_sc, psum_sc, *, W, C_total):
    # grid = (N, C // tc); the channel-tile axis (reduction) is last.
    c = pl.program_id(1)
    HW = x_ref.shape[-1]

    x = x_ref[0]                                                         # (tc, HW)
    tile_max = jnp.max(x, axis=0, keepdims=True).astype(jnp.float32)     # (1, HW)
    tile_sum = jnp.sum(x, axis=0, keepdims=True, dtype=jnp.float32)      # (1, HW)

    @pl.when(c == 0)
    def _():
        pmax_sc[...] = tile_max
        psum_sc[...] = tile_sum

    @pl.when(c > 0)
    def _():
        pmax_sc[...] = jnp.maximum(pmax_sc[...], tile_max)
        psum_sc[...] = psum_sc[...] + tile_sum

    @pl.when(c == pl.num_programs(1) - 1)
    def _():
        wvals = [w_ref[k] for k in range(2 * KSIZE * KSIZE)]
        w_idx = widx_ref[...]
        flat_idx = jax.lax.broadcasted_iota(jnp.int32, (1, HW), 1)
        taps = _build_taps(W, HW, w_idx, flat_idx)
        acc = _conv3x3(pmax_sc[...], psum_sc[...] * (1.0 / C_total), wvals, taps)
        s_ref[0] = jax.nn.sigmoid(acc + b_ref[0])                        # (1, HW) f32


def spatial_gate_apply_kernel(x_ref, s_ref, o_ref):
    x = x_ref[0]                                   # (tc, HW), input dtype
    s = s_ref[0].astype(x_ref.dtype)               # (1, HW)
    o_ref[0] = x * s


# ---------------------------------------------------------------------------
# Wrappers
# ---------------------------------------------------------------------------

def _chip_caps():
    """(physical VMEM bytes per TensorCore, is-2-TensorCore part) with safe fallbacks."""
    vmem_cap = 128 << 20
    try:
        vmem_cap = int(getattr(pltpu.get_tpu_info(), "vmem_capacity_bytes", vmem_cap))
    except Exception:
        pass
    two_tc = vmem_cap <= (64 << 20)          # v7x-class parts: 64 MiB / TC, 2 TCs
    try:
        if "v7" in jax.devices()[0].device_kind.lower():
            two_tc = True
    except Exception:
        pass
    return vmem_cap, two_tc


def _pick_tb(n, bytes_per_batch, budget_bytes, two_tc, max_tb=64):
    """Largest divisor of n (<= max_tb) whose (TB, C, HW) block fits the budget; on 2-TC parts
    keep >=2 grid steps when possible so both TensorCores get work."""
    divisors = [d for d in range(1, n + 1) if n % d == 0]
    fitting = [d for d in divisors if d <= max_tb and d * bytes_per_batch <= budget_bytes]
    if not fitting:
        return 1
    tb = max(fitting)
    if two_tc and n // tb < 2:
        smaller = [d for d in fitting if n // d >= 2]
        if smaller:
            tb = max(smaller)
    return tb


def _pick_channel_tile(C, HW, itemsize, budget_bytes):
    """Channel tile for the two-pass path: a divisor of C that is C itself or a multiple of 8
    (keeps (tc, HW) blocks sublane-aligned)."""
    cands = [d for d in range(1, C + 1) if C % d == 0 and (d == C or d % 8 == 0)]
    fitting = [d for d in cands if d * HW * itemsize <= budget_bytes]
    if fitting:
        return max(fitting)
    # TODO(synk): if even the smallest aligned channel tile overflows VMEM (huge H*W), an
    # additional halo-tiled spatial split would be required.
    return min(cands)


def _vmem_limit(block_bytes, vmem_cap):
    est = 4 * block_bytes + (4 << 20)            # ~double-buffered in+out blocks + slack
    return int(min(max(est, 16 << 20), int(vmem_cap * 0.75)))


def _spatial_gate_fused(x_flat, w_folded, bn_bias, W, vmem_cap, two_tc, budget):
    N, C, HW = x_flat.shape
    itemsize = x_flat.dtype.itemsize
    bytes_per_batch = C * HW * itemsize
    TB = _pick_tb(N, bytes_per_batch, budget, two_tc)
    block_bytes = TB * bytes_per_batch

    w_idx = (jnp.arange(HW, dtype=jnp.int32) % W).reshape(1, HW)

    cost = pl.CostEstimate(
        flops=int(3 * N * C * HW + 40 * N * HW),
        transcendentals=int(N * HW),
        bytes_accessed=int(2 * N * C * HW * itemsize),
    )

    kernel = functools.partial(spatial_gate_kernel, W=W)
    return pl.pallas_call(
        kernel,
        out_shape=jax.ShapeDtypeStruct((N, C, HW), x_flat.dtype),
        grid_spec=pltpu.PrefetchScalarGridSpec(
            num_scalar_prefetch=0,
            grid=(N // TB,),
            in_specs=[
                pl.BlockSpec(memory_space=pltpu.MemorySpace.SMEM),   # folded conv weights
                pl.BlockSpec(memory_space=pltpu.MemorySpace.SMEM),   # folded BN bias
                pl.BlockSpec((1, HW), lambda n: (0, 0)),             # w-coordinate map
                pl.BlockSpec((TB, C, HW), lambda n: (n, 0, 0)),      # x, TB batch rows/step
            ],
            out_specs=pl.BlockSpec((TB, C, HW), lambda n: (n, 0, 0)),
        ),
        compiler_params=pltpu.CompilerParams(
            # TODO(synk): evaluate pltpu.CORE_PARALLEL on the batch axis for v7x; plain
            # "parallel" is kept because it is known-good on all generations.
            dimension_semantics=("parallel",),
            vmem_limit_bytes=_vmem_limit(block_bytes, vmem_cap),
        ),
        cost_estimate=cost,
    )(w_folded, bn_bias, w_idx, x_flat)


def _spatial_gate_two_pass(x_flat, w_folded, bn_bias, W, vmem_cap, budget):
    N, C, HW = x_flat.shape
    itemsize = x_flat.dtype.itemsize
    tc = _pick_channel_tile(C, HW, itemsize, budget)
    vmem_limit = _vmem_limit(tc * HW * itemsize, vmem_cap)

    w_idx = (jnp.arange(HW, dtype=jnp.int32) % W).reshape(1, HW)

    # Pass 1: channel-tiled max/sum accumulation -> 3x3 conv -> sigmoid scale plane.
    scale = pl.pallas_call(
        functools.partial(spatial_scale_kernel, W=W, C_total=C),
        out_shape=jax.ShapeDtypeStruct((N, 1, HW), jnp.float32),
        grid_spec=pltpu.PrefetchScalarGridSpec(
            num_scalar_prefetch=0,
            grid=(N, C // tc),
            in_specs=[
                pl.BlockSpec(memory_space=pltpu.MemorySpace.SMEM),
                pl.BlockSpec(memory_space=pltpu.MemorySpace.SMEM),
                pl.BlockSpec((1, HW), lambda n, c: (0, 0)),
                pl.BlockSpec((1, tc, HW), lambda n, c: (n, c, 0)),
            ],
            out_specs=pl.BlockSpec((1, 1, HW), lambda n, c: (n, 0, 0)),
            scratch_shapes=[pltpu.VMEM((1, HW), jnp.float32),
                            pltpu.VMEM((1, HW), jnp.float32)],
        ),
        compiler_params=pltpu.CompilerParams(
            dimension_semantics=("parallel", "arbitrary"),
            vmem_limit_bytes=vmem_limit,
        ),
    )(w_folded, bn_bias, w_idx, x_flat)

    # Pass 2: gate multiply, channel-tiled.
    return pl.pallas_call(
        spatial_gate_apply_kernel,
        out_shape=jax.ShapeDtypeStruct((N, C, HW), x_flat.dtype),
        grid_spec=pltpu.PrefetchScalarGridSpec(
            num_scalar_prefetch=0,
            grid=(N, C // tc),
            in_specs=[
                pl.BlockSpec((1, tc, HW), lambda n, c: (n, c, 0)),
                pl.BlockSpec((1, 1, HW), lambda n, c: (n, 0, 0)),
            ],
            out_specs=pl.BlockSpec((1, tc, HW), lambda n, c: (n, c, 0)),
        ),
        compiler_params=pltpu.CompilerParams(
            dimension_semantics=("parallel", "parallel"),
            vmem_limit_bytes=vmem_limit,
        ),
    )(x_flat, scale)


def spatial_gate(x, conv_w, bn_gamma, bn_beta, bn_mean, bn_var, eps=1e-5,
                 *, force_two_pass=False, two_pass_budget=None):
    """x: (N, C, H, W). conv_w: (1, 2, 3, 3). bn_*: (1,). Returns (N, C, H, W)."""
    N, C, H, W = x.shape
    HW = H * W

    # Fold eval-mode BatchNorm: scale into the conv weights, keep only the bias.
    bn_scale = bn_gamma / jnp.sqrt(bn_var + eps)                        # (1,)
    bn_bias = (bn_beta - bn_mean * bn_scale).astype(jnp.float32)        # (1,)
    w_folded = (conv_w.astype(jnp.float32) * bn_scale[0]).reshape(-1)   # (18,)

    x_flat = x.reshape(N, C, HW)  # lane-dense layout; free for contiguous NCHW
    vmem_cap, two_tc = _chip_caps()
    bytes_per_batch = C * HW * x.dtype.itemsize
    budget = (4 << 20) if vmem_cap <= (64 << 20) else (8 << 20)

    # Fused path keeps whole (C, HW) batch slabs resident (double-buffered in+out).
    fused_fits = (4 * bytes_per_batch + (4 << 20)) <= int(0.7 * vmem_cap)

    if force_two_pass or not fused_fits:
        tp_budget = budget if two_pass_budget is None else two_pass_budget
        out_flat = _spatial_gate_two_pass(x_flat, w_folded, bn_bias, W, vmem_cap, tp_budget)
    else:
        out_flat = _spatial_gate_fused(x_flat, w_folded, bn_bias, W, vmem_cap, two_tc, budget)
    return out_flat.reshape(N, C, H, W)


def spatial_gate_reference(x, conv_w, bn_gamma, bn_beta, bn_mean, bn_var, eps=1e-5):
    """Pure-JAX reference (NCHW), mirrors the PyTorch forward in eval mode."""
    pooled = jnp.concatenate(
        [jnp.max(x, axis=1, keepdims=True), jnp.mean(x, axis=1, keepdims=True)], axis=1)
    conv = jax.lax.conv_general_dilated(
        pooled, conv_w, window_strides=(1, 1), padding=((PAD, PAD), (PAD, PAD)),
        dimension_numbers=("NCHW", "OIHW", "NCHW"))
    bn = (conv - bn_mean.reshape(1, -1, 1, 1)) / jnp.sqrt(bn_var.reshape(1, -1, 1, 1) + eps)
    bn = bn * bn_gamma.reshape(1, -1, 1, 1) + bn_beta.reshape(1, -1, 1, 1)
    return x * jax.nn.sigmoid(bn)


if __name__ == "__main__":
    key = jax.random.PRNGKey(0)
    kx, kw, kg, kb, km, kv, kx2 = jax.random.split(key, 7)

    # Deterministic synthetic parameters (BasicConv(2, 1, 3, padding=1, relu=False)).
    conv_w = 0.1 * jax.random.normal(kw, (1, 2, KSIZE, KSIZE), dtype=jnp.float32)
    bn_gamma = 1.0 + 0.1 * jax.random.normal(kg, (1,), dtype=jnp.float32)
    bn_beta = 0.1 * jax.random.normal(kb, (1,), dtype=jnp.float32)
    bn_mean = 0.1 * jax.random.normal(km, (1,), dtype=jnp.float32)
    bn_var = 1.0 + 0.1 * jnp.abs(jax.random.normal(kv, (1,), dtype=jnp.float32))

    # --- Test 1: fused single-pass path (batch-vectorized pool + conv) ---
    N, C, H, W = 2, 4, 16, 16
    x = jax.random.normal(kx, (N, C, H, W), dtype=jnp.float32)
    out = jax.block_until_ready(spatial_gate(x, conv_w, bn_gamma, bn_beta, bn_mean, bn_var))
    ref = spatial_gate_reference(x, conv_w, bn_gamma, bn_beta, bn_mean, bn_var)
    np.testing.assert_allclose(np.asarray(out), np.asarray(ref), rtol=1e-4, atol=1e-5)

    # --- Test 2: two-pass channel-tiled fallback, forced with a tiny budget so the
    #             C-reduction really gets tiled (tc=8 over C=16 -> 2 reduction steps) ---
    N2, C2, H2, W2 = 2, 16, 16, 16
    x2 = jax.random.normal(kx2, (N2, C2, H2, W2), dtype=jnp.float32)
    out2 = jax.block_until_ready(
        spatial_gate(x2, conv_w, bn_gamma, bn_beta, bn_mean, bn_var,
                     force_two_pass=True, two_pass_budget=8192))
    ref2 = spatial_gate_reference(x2, conv_w, bn_gamma, bn_beta, bn_mean, bn_var)
    np.testing.assert_allclose(np.asarray(out2), np.asarray(ref2), rtol=1e-4, atol=1e-5)

    print("KERNEL_OK")
</pallas_src>

<mosaic_0001>
module attributes {stable_mosaic.version = 11 : i64} {
  func.func @spatial_gate_kernel(%arg0: i32, %arg1: memref<18xf32, #tpu.memory_space<smem>>, %arg2: memref<1xf32, #tpu.memory_space<smem>>, %arg3: memref<1x256xi32, #tpu.memory_space<vmem>>, %arg4: memref<2x4x256xf32, #tpu.memory_space<vmem>>, %arg5: memref<2x4x256xf32, #tpu.memory_space<vmem>>) attributes {dimension_semantics = [#tpu.dimension_semantics<parallel>], iteration_bounds = array<i64: 1>, scalar_prefetch = 0 : i64, scratch_operands = 0 : i64, tpu.core_type = #tpu.core_type<tc>, window_params = [{transform_indices = @transform_0, window_bounds = array<i64: 18>}, {transform_indices = @transform_1, window_bounds = array<i64: 1>}, {pipeline_mode = #tpu.pipeline_mode<synchronous>, transform_indices = @transform_2, window_bounds = array<i64: 1, 256>}, {transform_indices = @transform_3, window_bounds = array<i64: 2, 4, 256>}, {transform_indices = @transform_4, window_bounds = array<i64: 2, 4, 256>}]} {
    %c0 = arith.constant 0 : index
    %0 = memref.load %arg1[%c0] : memref<18xf32, #tpu.memory_space<smem>>
    %c1 = arith.constant 1 : index
    %1 = memref.load %arg1[%c1] : memref<18xf32, #tpu.memory_space<smem>>
    %c2 = arith.constant 2 : index
    %2 = memref.load %arg1[%c2] : memref<18xf32, #tpu.memory_space<smem>>
    %c3 = arith.constant 3 : index
    %3 = memref.load %arg1[%c3] : memref<18xf32, #tpu.memory_space<smem>>
    %c4 = arith.constant 4 : index
    %4 = memref.load %arg1[%c4] : memref<18xf32, #tpu.memory_space<smem>>
    %c5 = arith.constant 5 : index
    %5 = memref.load %arg1[%c5] : memref<18xf32, #tpu.memory_space<smem>>
    %c6 = arith.constant 6 : index
    %6 = memref.load %arg1[%c6] : memref<18xf32, #tpu.memory_space<smem>>
    %c7 = arith.constant 7 : index
    %7 = memref.load %arg1[%c7] : memref<18xf32, #tpu.memory_space<smem>>
    %c8 = arith.constant 8 : index
    %8 = memref.load %arg1[%c8] : memref<18xf32, #tpu.memory_space<smem>>
    %c9 = arith.constant 9 : index
    %9 = memref.load %arg1[%c9] : memref<18xf32, #tpu.memory_space<smem>>
    %c10 = arith.constant 10 : index
    %10 = memref.load %arg1[%c10] : memref<18xf32, #tpu.memory_space<smem>>
    %c11 = arith.constant 11 : index
    %11 = memref.load %arg1[%c11] : memref<18xf32, #tpu.memory_space<smem>>
    %c12 = arith.constant 12 : index
    %12 = memref.load %arg1[%c12] : memref<18xf32, #tpu.memory_space<smem>>
    %c13 = arith.constant 13 : index
    %13 = memref.load %arg1[%c13] : memref<18xf32, #tpu.memory_space<smem>>
    %c14 = arith.constant 14 : index
    %14 = memref.load %arg1[%c14] : memref<18xf32, #tpu.memory_space<smem>>
    %c15 = arith.constant 15 : index
    %15 = memref.load %arg1[%c15] : memref<18xf32, #tpu.memory_space<smem>>
    %c16 = arith.constant 16 : index
    %16 = memref.load %arg1[%c16] : memref<18xf32, #tpu.memory_space<smem>>
    %c17 = arith.constant 17 : index
    %17 = memref.load %arg1[%c17] : memref<18xf32, #tpu.memory_space<smem>>
    %c0_0 = arith.constant 0 : index
    %18 = memref.load %arg2[%c0_0] : memref<1xf32, #tpu.memory_space<smem>>
    %c0_1 = arith.constant 0 : index
    %c0_2 = arith.constant 0 : index
    %19 = vector.load %arg3[%c0_1, %c0_2] : memref<1x256xi32, #tpu.memory_space<vmem>>, vector<1x256xi32>
    %20 = tpu.iota {dimensions = array<i32: 1>} : vector<1x256xi32>
    %c16_i32 = arith.constant 16 : i32
    %21 = vector.broadcast %c16_i32 : i32 to vector<1x256xi32>
    %22 = arith.cmpi sge, %20, %21 : vector<1x256xi32>
    %c1_i32 = arith.constant 1 : i32
    %23 = vector.broadcast %c1_i32 : i32 to vector<1x256xi32>
    %24 = arith.cmpi sge, %19, %23 : vector<1x256xi32>
    %25 = arith.andi %22, %24 : vector<1x256xi1>
    %c16_i32_3 = arith.constant 16 : i32
    %26 = vector.broadcast %c16_i32_3 : i32 to vector<1x256xi32>
    %27 = arith.cmpi sge, %20, %26 : vector<1x256xi32>
    %c16_i32_4 = arith.constant 16 : i32
    %28 = vector.broadcast %c16_i32_4 : i32 to vector<1x256xi32>
    %29 = arith.cmpi sge, %20, %28 : vector<1x256xi32>
    %c15_i32 = arith.constant 15 : i32
    %30 = vector.broadcast %c15_i32 : i32 to vector<1x256xi32>
    %31 = arith.cmpi slt, %19, %30 : vector<1x256xi32>
    %32 = arith.andi %29, %31 : vector<1x256xi1>
    %c1_i32_5 = arith.constant 1 : i32
    %33 = vector.broadcast %c1_i32_5 : i32 to vector<1x256xi32>
    %34 = arith.cmpi sge, %19, %33 : vector<1x256xi32>
    %c15_i32_6 = arith.constant 15 : i32
    %35 = vector.broadcast %c15_i32_6 : i32 to vector<1x256xi32>
    %36 = arith.cmpi slt, %19, %35 : vector<1x256xi32>
    %c240_i32 = arith.constant 240 : i32
    %37 = vector.broadcast %c240_i32 : i32 to vector<1x256xi32>
    %38 = arith.cmpi slt, %20, %37 : vector<1x256xi32>
    %c1_i32_7 = arith.constant 1 : i32
    %39 = vector.broadcast %c1_i32_7 : i32 to vector<1x256xi32>
    %40 = arith.cmpi sge, %19, %39 : vector<1x256xi32>
    %41 = arith.andi %38, %40 : vector<1x256xi1>
    %c240_i32_8 = arith.constant 240 : i32
    %42 = vector.broadcast %c240_i32_8 : i32 to vector<1x256xi32>
    %43 = arith.cmpi slt, %20, %42 : vector<1x256xi32>
    %c240_i32_9 = arith.constant 240 : i32
    %44 = vector.broadcast %c240_i32_9 : i32 to vector<1x256xi32>
    %45 = arith.cmpi slt, %20, %44 : vector<1x256xi32>
    %c15_i32_10 = arith.constant 15 : i32
    %46 = vector.broadcast %c15_i32_10 : i32 to vector<1x256xi32>
    %47 = arith.cmpi slt, %19, %46 : vector<1x256xi32>
    %48 = arith.andi %45, %47 : vector<1x256xi1>
    %c0_11 = arith.constant 0 : index
    %c0_12 = arith.constant 0 : index
    %c0_13 = arith.constant 0 : index
    %49 = vector.load %arg4[%c0_11, %c0_12, %c0_13] : memref<2x4x256xf32, #tpu.memory_space<vmem>>, vector<2x4x256xf32>
    %cst = arith.constant dense<0xFF800000> : vector<2x256xf32>
    %50 = vector.multi_reduction <maximumf>, %49, %cst [1] : vector<2x4x256xf32> to vector<2x256xf32>
    %c0_14 = arith.constant 0 : index
    %c0_15 = arith.constant 0 : index
    %c0_16 = arith.constant 0 : index
    %51 = vector.load %arg4[%c0_14, %c0_15, %c0_16] : memref<2x4x256xf32, #tpu.memory_space<vmem>>, vector<2x4x256xf32>
    %cst_17 = arith.constant dense<0.000000e+00> : vector<2x256xf32>
    %52 = vector.multi_reduction <add>, %51, %cst_17 [1] : vector<2x4x256xf32> to vector<2x256xf32>
    %cst_18 = arith.constant 2.500000e-01 : f32
    %53 = vector.broadcast %cst_18 : f32 to vector<2x256xf32>
    %54 = arith.mulf %52, %53 : vector<2x256xf32>
    %cst_19 = arith.constant 0.000000e+00 : f32
    %55 = vector.broadcast %cst_19 : f32 to vector<2x256xf32>
    %c17_i32 = arith.constant 17 : i32
    %56 = tpu.dynamic_rotate %50 by %c17_i32 dim 1 : vector<2x256xf32>, i32 -> vector<2x256xf32>
    %c17_i32_20 = arith.constant 17 : i32
    %57 = tpu.dynamic_rotate %54 by %c17_i32_20 dim 1 : vector<2x256xf32>, i32 -> vector<2x256xf32>
    %58 = vector.broadcast %0 : f32 to vector<2x256xf32>
    %59 = arith.mulf %58, %56 : vector<2x256xf32>
    %60 = vector.broadcast %9 : f32 to vector<2x256xf32>
    %61 = arith.mulf %60, %57 : vector<2x256xf32>
    %62 = arith.addf %59, %61 : vector<2x256xf32>
    %cst_21 = arith.constant 0.000000e+00 : f32
    %63 = vector.shape_cast %25 : vector<1x256xi1> to vector<1x256xi1>
    %64 = vector.broadcast %63 : vector<1x256xi1> to vector<2x256xi1>
    %65 = vector.broadcast %cst_21 : f32 to vector<2x256xf32>
    %66 = arith.select %64, %62, %65 : vector<2x256xi1>, vector<2x256xf32>
    %67 = arith.addf %55, %66 : vector<2x256xf32>
    %c16_i32_22 = arith.constant 16 : i32
    %68 = tpu.dynamic_rotate %50 by %c16_i32_22 dim 1 : vector<2x256xf32>, i32 -> vector<2x256xf32>
    %c16_i32_23 = arith.constant 16 : i32
    %69 = tpu.dynamic_rotate %54 by %c16_i32_23 dim 1 : vector<2x256xf32>, i32 -> vector<2x256xf32>
    %70 = vector.broadcast %1 : f32 to vector<2x256xf32>
    %71 = arith.mulf %70, %68 : vector<2x256xf32>
    %72 = vector.broadcast %10 : f32 to vector<2x256xf32>
    %73 = arith.mulf %72, %69 : vector<2x256xf32>
    %74 = arith.addf %71, %73 : vector<2x256xf32>
    %cst_24 = arith.constant 0.000000e+00 : f32
    %75 = vector.shape_cast %27 : vector<1x256xi1> to vector<1x256xi1>
    %76 = vector.broadcast %75 : vector<1x256xi1> to vector<2x256xi1>
    %77 = vector.broadcast %cst_24 : f32 to vector<2x256xf32>
    %78 = arith.select %76, %74, %77 : vector<2x256xi1>, vector<2x256xf32>
    %79 = arith.addf %67, %78 : vector<2x256xf32>
    %c15_i32_25 = arith.constant 15 : i32
    %80 = tpu.dynamic_rotate %50 by %c15_i32_25 dim 1 : vector<2x256xf32>, i32 -> vector<2x256xf32>
    %c15_i32_26 = arith.constant 15 : i32
    %81 = tpu.dynamic_rotate %54 by %c15_i32_26 dim 1 : vector<2x256xf32>, i32 -> vector<2x256xf32>
    %82 = vector.broadcast %2 : f32 to vector<2x256xf32>
    %83 = arith.mulf %82, %80 : vector<2x256xf32>
    %84 = vector.broadcast %11 : f32 to vector<2x256xf32>
    %85 = arith.mulf %84, %81 : vector<2x256xf32>
    %86 = arith.addf %83, %85 : vector<2x256xf32>
    %cst_27 = arith.constant 0.000000e+00 : f32
    %87 = vector.shape_cast %32 : vector<1x256xi1> to vector<1x256xi1>
    %88 = vector.broadcast %87 : vector<1x256xi1> to vector<2x256xi1>
    %89 = vector.broadcast %cst_27 : f32 to vector<2x256xf32>
    %90 = arith.select %88, %86, %89 : vector<2x256xi1>, vector<2x256xf32>
    %91 = arith.addf %79, %90 : vector<2x256xf32>
    %c1_i32_28 = arith.constant 1 : i32
    %92 = tpu.dynamic_rotate %50 by %c1_i32_28 dim 1 : vector<2x256xf32>, i32 -> vector<2x256xf32>
    %c1_i32_29 = arith.constant 1 : i32
    %93 = tpu.dynamic_rotate %54 by %c1_i32_29 dim 1 : vector<2x256xf32>, i32 -> vector<2x256xf32>
    %94 = vector.broadcast %3 : f32 to vector<2x256xf32>
    %95 = arith.mulf %94, %92 : vector<2x256xf32>
    %96 = vector.broadcast %12 : f32 to vector<2x256xf32>
    %97 = arith.mulf %96, %93 : vector<2x256xf32>
    %98 = arith.addf %95, %97 : vector<2x256xf32>
    %cst_30 = arith.constant 0.000000e+00 : f32
    %99 = vector.shape_cast %34 : vector<1x256xi1> to vector<1x256xi1>
    %100 = vector.broadcast %99 : vector<1x256xi1> to vector<2x256xi1>
    %101 = vector.broadcast %cst_30 : f32 to vector<2x256xf32>
    %102 = arith.select %100, %98, %101 : vector<2x256xi1>, vector<2x256xf32>
    %103 = arith.addf %91, %102 : vector<2x256xf32>
    %104 = vector.broadcast %4 : f32 to vector<2x256xf32>
    %105 = arith.mulf %104, %50 : vector<2x256xf32>
    %106 = vector.broadcast %13 : f32 to vector<2x256xf32>
    %107 = arith.mulf %106, %54 : vector<2x256xf32>
    %108 = arith.addf %105, %107 : vector<2x256xf32>
    %109 = arith.addf %103, %108 : vector<2x256xf32>
    %c255_i32 = arith.constant 255 : i32
    %110 = tpu.dynamic_rotate %50 by %c255_i32 dim 1 : vector<2x256xf32>, i32 -> vector<2x256xf32>
    %c255_i32_31 = arith.constant 255 : i32
    %111 = tpu.dynamic_rotate %54 by %c255_i32_31 dim 1 : vector<2x256xf32>, i32 -> vector<2x256xf32>
    %112 = vector.broadcast %5 : f32 to vector<2x256xf32>
    %113 = arith.mulf %112, %110 : vector<2x256xf32>
    %114 = vector.broadcast %14 : f32 to vector<2x256xf32>
    %115 = arith.mulf %114, %111 : vector<2x256xf32>
    %116 = arith.addf %113, %115 : vector<2x256xf32>
    %cst_32 = arith.constant 0.000000e+00 : f32
    %117 = vector.shape_cast %36 : vector<1x256xi1> to vector<1x256xi1>
    %118 = vector.broadcast %117 : vector<1x256xi1> to vector<2x256xi1>
    %119 = vector.broadcast %cst_32 : f32 to vector<2x256xf32>
    %120 = arith.select %118, %116, %119 : vector<2x256xi1>, vector<2x256xf32>
    %121 = arith.addf %109, %120 : vector<2x256xf32>
    %c241_i32 = arith.constant 241 : i32
    %122 = tpu.dynamic_rotate %50 by %c241_i32 dim 1 : vector<2x256xf32>, i32 -> vector<2x256xf32>
    %c241_i32_33 = arith.constant 241 : i32
    %123 = tpu.dynamic_rotate %54 by %c241_i32_33 dim 1 : vector<2x256xf32>, i32 -> vector<2x256xf32>
    %124 = vector.broadcast %6 : f32 to vector<2x256xf32>
    %125 = arith.mulf %124, %122 : vector<2x256xf32>
    %126 = vector.broadcast %15 : f32 to vector<2x256xf32>
    %127 = arith.mulf %126, %123 : vector<2x256xf32>
    %128 = arith.addf %125, %127 : vector<2x256xf32>
    %cst_34 = arith.constant 0.000000e+00 : f32
    %129 = vector.shape_cast %41 : vector<1x256xi1> to vector<1x256xi1>
    %130 = vector.broadcast %129 : vector<1x256xi1> to vector<2x256xi1>
    %131 = vector.broadcast %cst_34 : f32 to vector<2x256xf32>
    %132 = arith.select %130, %128, %131 : vector<2x256xi1>, vector<2x256xf32>
    %133 = arith.addf %121, %132 : vector<2x256xf32>
    %c240_i32_35 = arith.constant 240 : i32
    %134 = tpu.dynamic_rotate %50 by %c240_i32_35 dim 1 : vector<2x256xf32>, i32 -> vector<2x256xf32>
    %c240_i32_36 = arith.constant 240 : i32
    %135 = tpu.dynamic_rotate %54 by %c240_i32_36 dim 1 : vector<2x256xf32>, i32 -> vector<2x256xf32>
    %136 = vector.broadcast %7 : f32 to vector<2x256xf32>
    %137 = arith.mulf %136, %134 : vector<2x256xf32>
    %138 = vector.broadcast %16 : f32 to vector<2x256xf32>
    %139 = arith.mulf %138, %135 : vector<2x256xf32>
    %140 = arith.addf %137, %139 : vector<2x256xf32>
    %cst_37 = arith.constant 0.000000e+00 : f32
    %141 = vector.shape_cast %43 : vector<1x256xi1> to vector<1x256xi1>
    %142 = vector.broadcast %141 : vector<1x256xi1> to vector<2x256xi1>
    %143 = vector.broadcast %cst_37 : f32 to vector<2x256xf32>
    %144 = arith.select %142, %140, %143 : vector<2x256xi1>, vector<2x256xf32>
    %145 = arith.addf %133, %144 : vector<2x256xf32>
    %c239_i32 = arith.constant 239 : i32
    %146 = tpu.dynamic_rotate %50 by %c239_i32 dim 1 : vector<2x256xf32>, i32 -> vector<2x256xf32>
    %c239_i32_38 = arith.constant 239 : i32
    %147 = tpu.dynamic_rotate %54 by %c239_i32_38 dim 1 : vector<2x256xf32>, i32 -> vector<2x256xf32>
    %148 = vector.broadcast %8 : f32 to vector<2x256xf32>
    %149 = arith.mulf %148, %146 : vector<2x256xf32>
    %150 = vector.broadcast %17 : f32 to vector<2x256xf32>
    %151 = arith.mulf %150, %147 : vector<2x256xf32>
    %152 = arith.addf %149, %151 : vector<2x256xf32>
    %cst_39 = arith.constant 0.000000e+00 : f32
    %153 = vector.shape_cast %48 : vector<1x256xi1> to vector<1x256xi1>
    %154 = vector.broadcast %153 : vector<1x256xi1> to vector<2x256xi1>
    %155 = vector.broadcast %cst_39 : f32 to vector<2x256xf32>
    %156 = arith.select %154, %152, %155 : vector<2x256xi1>, vector<2x256xf32>
    %157 = arith.addf %145, %156 : vector<2x256xf32>
    %158 = vector.broadcast %18 : f32 to vector<2x256xf32>
    %159 = arith.addf %157, %158 : vector<2x256xf32>
    %160 = arith.negf %159 : vector<2x256xf32>
    %161 = math.exp %160 : vector<2x256xf32>
    %cst_40 = arith.constant 1.000000e+00 : f32
    %162 = vector.broadcast %cst_40 : f32 to vector<2x256xf32>
    %163 = arith.addf %162, %161 : vector<2x256xf32>
    %164 = arith.divf %162, %163 : vector<2x256xf32>
    %c0_41 = arith.constant 0 : index
    %c0_42 = arith.constant 0 : index
    %c0_43 = arith.constant 0 : index
    %165 = vector.load %arg4[%c0_41, %c0_42, %c0_43] : memref<2x4x256xf32, #tpu.memory_space<vmem>>, vector<1x4x256xf32>
    %166 = vector.shape_cast %165 : vector<1x4x256xf32> to vector<4x256xf32>
    %167 = vector.extract_strided_slice %164 {offsets = [0, 0], sizes = [1, 256], strides = [1, 1]} : vector<2x256xf32> to vector<1x256xf32>
    %168 = vector.broadcast %167 : vector<1x256xf32> to vector<4x256xf32>
    %169 = arith.mulf %166, %168 : vector<4x256xf32>
    %c0_44 = arith.constant 0 : index
    %c0_45 = arith.constant 0 : index
    %c0_46 = arith.constant 0 : index
    %170 = vector.load %arg5[%c0_44, %c0_45, %c0_46] : memref<2x4x256xf32, #tpu.memory_space<vmem>>, vector<1x4x256xf32>
    %171 = vector.shape_cast %170 : vector<1x4x256xf32> to vector<4x256xf32>
    %172 = vector.shape_cast %169 : vector<4x256xf32> to vector<1x4x256xf32>
    tpu.vector_store %arg5[%c0_44, %c0_45, %c0_46], %172 {strides = array<i32>} : memref<2x4x256xf32, #tpu.memory_space<vmem>>, vector<1x4x256xf32>,
    %c1_47 = arith.constant 1 : index
    %c0_48 = arith.constant 0 : index
    %c0_49 = arith.constant 0 : index
    %173 = vector.load %arg4[%c1_47, %c0_48, %c0_49] : memref<2x4x256xf32, #tpu.memory_space<vmem>>, vector<1x4x256xf32>
    %174 = vector.shape_cast %173 : vector<1x4x256xf32> to vector<4x256xf32>
    %175 = vector.extract_strided_slice %164 {offsets = [1, 0], sizes = [1, 256], strides = [1, 1]} : vector<2x256xf32> to vector<1x256xf32>
    %176 = vector.broadcast %175 : vector<1x256xf32> to vector<4x256xf32>
    %177 = arith.mulf %174, %176 : vector<4x256xf32>
    %c1_50 = arith.constant 1 : index
    %c0_51 = arith.constant 0 : index
    %c0_52 = arith.constant 0 : index
    %178 = vector.load %arg5[%c1_50, %c0_51, %c0_52] : memref<2x4x256xf32, #tpu.memory_space<vmem>>, vector<1x4x256xf32>
    %179 = vector.shape_cast %178 : vector<1x4x256xf32> to vector<4x256xf32>
    %180 = vector.shape_cast %177 : vector<4x256xf32> to vector<1x4x256xf32>
    tpu.vector_store %arg5[%c1_50, %c0_51, %c0_52], %180 {strides = array<i32>} : memref<2x4x256xf32, #tpu.memory_space<vmem>>, vector<1x4x256xf32>,
    return
  }
  func.func @transform_0(%arg0: i32) -> i32 {
    %c0_i32 = arith.constant 0 : i32
    %c0_i32_0 = arith.constant 0 : i32
    return %c0_i32 : i32
  }
  func.func @transform_1(%arg0: i32) -> i32 {
    %c0_i32 = arith.constant 0 : i32
    %c0_i32_0 = arith.constant 0 : i32
    return %c0_i32 : i32
  }
  func.func @transform_2(%arg0: i32) -> (i32, i32) {
    %c0_i32 = arith.constant 0 : i32
    %c0_i32_0 = arith.constant 0 : i32
    %c0_i32_1 = arith.constant 0 : i32
    return %c0_i32, %c0_i32_0 : i32, i32
  }
  func.func @transform_3(%arg0: i32) -> (i32, i32, i32) {
    %c0_i32 = arith.constant 0 : i32
    %c0_i32_0 = arith.constant 0 : i32
    %c0_i32_1 = arith.constant 0 : i32
    return %arg0, %c0_i32, %c0_i32_0 : i32, i32, i32
  }
  func.func @transform_4(%arg0: i32) -> (i32, i32, i32) {
    %c0_i32 = arith.constant 0 : i32
    %c0_i32_0 = arith.constant 0 : i32
    %c0_i32_1 = arith.constant 0 : i32
    return %arg0, %c0_i32, %c0_i32_0 : i32, i32, i32
  }
}

</mosaic_0001>

<llo_original>
// kernel: tpu_custom_call.1
$region0: #{tpu_custom_call.1}
  #allocation0 [shape = 'u32[]', space=smem, size = 0x4, offset = 0x4, fixed_abs, tag = 'smem constant byte address 0x4 - core index']
  #allocation1 [shape = 'u32[144,128]{1,0:T(1,128)}', space=vmem, size = 0x12000, scoped, tag = 'internal scratch']
  #allocation2 [shape = 'f32[1]{0:T(128)S(6)}', space=smem, size = 0x200, scoped, tag = 'scoped memory for tpu_custom_call.1']
  %s0 = inlined_call_operand.vmem [shape: f32[18], index: 0, kind: input, shape index: {}]
  %s1 = inlined_call_operand.<no memory space> [shape: f32[1], index: 1, kind: input, shape index: {}]
  %s2 = inlined_call_operand.vmem [shape: s32[1,256], index: 2, kind: input, shape index: {}]
  %s3 = inlined_call_operand.hbm [shape: f32[2,4,256], index: 3, kind: input, shape index: {}]
  %s4 = inlined_call_operand.hbm [shape: f32[2,4,256], index: 4, kind: output, shape index: {}]
  %s5 = sld [smem:[#allocation0]]
  $region34: #{tpu_custom_call.1} parent=0
    _
  %s7 = ssub.s32 1, %s5
  %s8 = scalar_select 0, %s7, %s5
  %9 = sst [smem:[#allocation2]] %s1
  $region1: #{tpu_custom_call.1} parent=0
    #allocation3 [shape = 'u8[512]{0}', space=smem, size = 0x200, scoped, tag = 'input window, operand 0, single buffered']
    #allocation4 [shape = 's32[1]{0}', space=sflag, size = 0x4, scoped, tag = 'scoped memory for tpu_custom_call.1']
    #allocation5 [shape = 's32[1]{0}', space=sflag, size = 0x4, scoped, tag = 'scoped memory for tpu_custom_call.1']
    #allocation6 [shape = 's32[1]{0}', space=sflag, size = 0x4, scoped, tag = 'scoped memory for tpu_custom_call.1']
    #allocation7 [shape = 'u8[8192]{0}', space=vmem, size = 0x2000, scoped, tag = 'input window, operand 3, single buffered']
    #allocation8 [shape = 'u8[8192]{0}', space=vmem, size = 0x2000, scoped, tag = 'output window, operand 0, single buffered']
    %10 = vsyncpa [#allocation6], 0
    %11 = vsyncpa [#allocation4], 0
    %12 = vsyncpa [#allocation5], 0
    // Predicated region
    $region2: #{tpu_custom_call.1} parent=1 // pred_check
      _
    $region3: #{tpu_custom_call.1} parent=1 // pred_check_branch
      %14 = sbr.rel (0) target = $region5
    $region4: #{tpu_custom_call.1} parent=1 // pred_region
      %s16 = ssub.s32 16, 16
      %17 = vsyncadd [#allocation6], %s16
      %s19 = sshll.u32 %s0, 4
      %s20 = int_to_ptr.vmem [resolvable:$true] %s19
      %22 = dma.vmem_to_smem %s20, 16, [#allocation3], [#allocation6]
    $region5: #{tpu_custom_call.1} parent=1 // pred_fallthru
      _
    // Predicated region
    $region6: #{tpu_custom_call.1} parent=1 // pred_check
      _
    $region7: #{tpu_custom_call.1} parent=1 // pred_check_branch
      %24 = sbr.rel (0) target = $region9
    $region8: #{tpu_custom_call.1} parent=1 // pred_region
      _
    $region9: #{tpu_custom_call.1} parent=1 // pred_fallthru
      _
    // Predicated region
    $region10: #{tpu_custom_call.1} parent=1 // pred_check
      _
    $region11: #{tpu_custom_call.1} parent=1 // pred_check_branch
      %26 = sbr.rel (0) target = $region13
    $region12: #{tpu_custom_call.1} parent=1 // pred_region
      _
    $region13: #{tpu_custom_call.1} parent=1 // pred_fallthru
      _
    // Predicated region
    $region14: #{tpu_custom_call.1} parent=1 // pred_check
      _
    $region15: #{tpu_custom_call.1} parent=1 // pred_check_branch
      %28 = sbr.rel (0) target = $region17
    $region16: #{tpu_custom_call.1} parent=1 // pred_region
      %s30 = ssub.s32 256, 256
      %31 = vsyncadd [#allocation4], %s30
      %s32 = sshll.u32 [#allocation7], 4
      %s33 = int_to_ptr.vmem [resolvable:$true] %s32
      %38 = dma.hbm_to_vmem [thread:$0]  %s3, 256, %s33, [#allocation4], 128, 128, 8
    $region17: #{tpu_custom_call.1} parent=1 // pred_fallthru
      _
    // Predicated region
    $region18: #{tpu_custom_call.1} parent=1 // pred_check
      _
    $region19: #{tpu_custom_call.1} parent=1 // pred_check_branch
      %40 = sbr.rel (0) target = $region21
    $region20: #{tpu_custom_call.1} parent=1 // pred_region
      %41 = dma.done [#allocation6], 16
    $region21: #{tpu_custom_call.1} parent=1 // pred_fallthru
      _
    // Predicated region
    $region22: #{tpu_custom_call.1} parent=1 // pred_check
      _
    $region23: #{tpu_custom_call.1} parent=1 // pred_check_branch
      %43 = sbr.rel (0) target = $region25
    $region24: #{tpu_custom_call.1} parent=1 // pred_region
      %44 = dma.done [#allocation4], 256
    $region25: #{tpu_custom_call.1} parent=1 // pred_fallthru
      _
    %45 = sfence
    %s46 = sld [smem:[#allocation3]]
    %s47 = sld [smem:[#allocation3 + $0x1]]
    %s48 = sld [smem:[#allocation3 + $0x2]]
    %s49 = sld [smem:[#allocation3 + $0x3]]
    %s50 = sld [smem:[#allocation3 + $0x4]]
    %s51 = sld [smem:[#allocation3 + $0x5]]
    %s52 = sld [smem:[#allocation3 + $0x6]]
    %s53 = sld [smem:[#allocation3 + $0x7]]
    %s54 = sld [smem:[#allocation3 + $0x8]]
    %s55 = sld [smem:[#allocation3 + $0x9]]
    %s56 = sld [smem:[#allocation3 + $0xa]]
    %s57 = sld [smem:[#allocation3 + $0xb]]
    %s58 = sld [smem:[#allocation3 + $0xc]]
    %s59 = sld [smem:[#allocation3 + $0xd]]
    %s60 = sld [smem:[#allocation3 + $0xe]]
    %s61 = sld [smem:[#allocation3 + $0xf]]
    %s62 = sld [smem:[#allocation3 + $0x10]]
    %s63 = sld [smem:[#allocation3 + $0x11]]
    %s64 = sld [smem:[#allocation2]]
    %v65 = vld [vmem:[%s2] sm:$0x3]
    %v66 = vlaneseq
    %v67 = vand.u32 %v66, 127
    %v68 = vadd.s32 %v67, 128
    %vm69 = vcmp.ge.s32.totalorder %v67, 16
    %vm70 = vcmp.ge.s32.totalorder %v68, 16
    %vm71 = vcmp.ge.s32.totalorder %v65, 1
    %v72 = vsel %vm71, 1, 0
    %v73 = vlaneseq
    %v74 = vshrl.u32 %v73, 7
    %v75 = vsub.s32 0, %v74
    %v76 = vrot.slane %v72, %v75
    %v77 = vlaneseq
    %v78 = vshrl.u32 %v77, 7
    %v79 = vsub.s32 1, %v78
    %v80 = vrot.slane %v72, %v79
    %vm81 = vcmp.ne.s32.totalorder %v76, 0
    %vm82 = vcmp.ne.s32.totalorder %v80, 0
    %vm83 = vmand %vm69, %vm81
    %vm84 = vmand %vm70, %vm82
    %vm85 = vcmp.lt.s32.totalorder %v65, 15
    %v86 = vsel %vm85, 1, 0
    %v87 = vlaneseq
    %v88 = vshrl.u32 %v87, 7
    %v89 = vsub.s32 0, %v88
    %v90 = vrot.slane %v86, %v89
    %v91 = vlaneseq
    %v92 = vshrl.u32 %v91, 7
    %v93 = vsub.s32 1, %v92
    %v94 = vrot.slane %v86, %v93
    %vm95 = vcmp.ne.s32.totalorder %v90, 0
    %vm96 = vcmp.ne.s32.totalorder %v94, 0
    %vm97 = vmand %vm69, %vm95
    %vm98 = vmand %vm70, %vm96
    %vm99 = vcmp.lt.s32.totalorder %v67, 240
    %vm100 = vcmp.lt.s32.totalorder %v68, 240
    %vm101 = vmand %vm99, %vm81
    %vm102 = vmand %vm100, %vm82
    %vm103 = vmand %vm99, %vm95
    %vm104 = vmand %vm100, %vm96
    %v105 = vld [vmem:[#allocation7] sm:$0xff]
    %v106 = vld [vmem:[#allocation7 + $0x8] sm:$0xff]
    %v109 = vcombine.high %v105, %v105
    %v110 = vcombine.high %v106, %v106
    %vm113 = vcmask 1043456
    %v114 = vsel %vm113, %v105, -inf
    %v115 = vrot.slane %v114, 4
    %v116 = vmax.f32 %v114, %v115
    %v117 = vrot.slane %v116, 2
    %v118 = vmax.f32 %v116, %v117
    %v119 = vrot.slane %v118, 1
    %v120 = vmax.f32 %v118, %v119
    %v121 = vsel %vm113, %v109, -inf
    %v122 = vrot.slane %v121, 4
    %v123 = vmax.f32 %v121, %v122
    %v124 = vrot.slane %v123, 2
    %v125 = vmax.f32 %v123, %v124
    %v126 = vrot.slane %v125, 1
    %v127 = vmax.f32 %v125, %v126
    %v128 = vsel %vm113, %v106, -inf
    %v129 = vrot.slane %v128, 4
    %v130 = vmax.f32 %v128, %v129
    %v131 = vrot.slane %v130, 2
    %v132 = vmax.f32 %v130, %v131
    %v133 = vrot.slane %v132, 1
    %v134 = vmax.f32 %v132, %v133
    %v135 = vsel %vm113, %v110, -inf
    %v136 = vrot.slane %v135, 4
    %v137 = vmax.f32 %v135, %v136
    %v138 = vrot.slane %v137, 2
    %v139 = vmax.f32 %v137, %v138
    %v140 = vrot.slane %v139, 1
    %v141 = vmax.f32 %v139, %v140
    %v142 = vsel %vm113, %v105, 0.0
    %v143 = vrot.slane %v142, 4
    %v144 = vadd.f32 %v142, %v143
    %v145 = vrot.slane %v144, 2
    %v146 = vadd.f32 %v144, %v145
    %v147 = vrot.slane %v146, 1
    %v148 = vadd.f32 %v146, %v147
    %v149 = vsel %vm113, %v109, 0.0
    %v150 = vrot.slane %v149, 4
    %v151 = vadd.f32 %v149, %v150
    %v152 = vrot.slane %v151, 2
    %v153 = vadd.f32 %v151, %v152
    %v154 = vrot.slane %v153, 1
    %v155 = vadd.f32 %v153, %v154
    %v156 = vsel %vm113, %v106, 0.0
    %v157 = vrot.slane %v156, 4
    %v158 = vadd.f32 %v156, %v157
    %v159 = vrot.slane %v158, 2
    %v160 = vadd.f32 %v158, %v159
    %v161 = vrot.slane %v160, 1
    %v162 = vadd.f32 %v160, %v161
    %v163 = vsel %vm113, %v110, 0.0
    %v164 = vrot.slane %v163, 4
    %v165 = vadd.f32 %v163, %v164
    %v166 = vrot.slane %v165, 2
    %v167 = vadd.f32 %v165, %v166
    %v168 = vrot.slane %v167, 1
    %v169 = vadd.f32 %v167, %v168
    %v170 = vmul.f32 %v148, 0.25
    %v171 = vmul.f32 %v155, 0.25
    %v172 = vmul.f32 %v162, 0.25
    %v173 = vmul.f32 %v169, 0.25
    %vm178 = vcmask 1041409
    %v179 = vsel %vm178, %v134, %v120
    %v180 = vsel %vm178, %v141, %v127
    %183 = vrot.lane.b32.xlu0 %v179, 17
    %v184 = vpop.permute.xlu0 %183
    %185 = vrot.lane.b32.xlu0 %v180, 17
    %v186 = vpop.permute.xlu0 %185
    %vm187 = vcmp.lt.s32.totalorder %v67, 17
    %v188 = vsel %vm187, %v184, %v186
    %v189 = vsel %vm187, %v186, %v184
    %v194 = vsel %vm178, %v172, %v170
    %v195 = vsel %vm178, %v173, %v171
    %198 = vrot.lane.b32.xlu0 %v194, 17
    %v199 = vpop.permute.xlu0 %198
    %200 = vrot.lane.b32.xlu0 %v195, 17
    %v201 = vpop.permute.xlu0 %200
    %v202 = vsel %vm187, %v199, %v201
    %v203 = vsel %vm187, %v201, %v199
    %v204 = vstv %s46
    %v205 = vmul.f32 %v204, %v189
    %v206 = vmul.f32 %v204, %v188
    %v207 = vstv %s55
    %v208 = vmul.f32 %v207, %v203
    %v209 = vmul.f32 %v207, %v202
    %v210 = vadd.f32 %v205, %v208
    %v211 = vadd.f32 %v206, %v209
    %v212 = vsel %vm83, 1, 0
    %v213 = vsel %vm84, 1, 0
    %v214 = vlaneseq
    %v215 = vshrl.u32 %v214, 7
    %v216 = vsub.s32 0, %v215
    %v217 = vrot.slane %v212, %v216
    %v218 = vlaneseq
    %v219 = vshrl.u32 %v218, 7
    %v220 = vsub.s32 0, %v219
    %v221 = vrot.slane %v213, %v220
    %vm222 = vcmp.eq.s32.totalorder %v217, 1
    %vm223 = vcmp.eq.s32.totalorder %v221, 1
    %v224 = vsel %vm222, %v210, 0.0
    %v225 = vsel %vm223, %v211, 0.0
    %v226 = vadd.f32 %v224, 0.0
    %v227 = vadd.f32 %v225, 0.0
    %228 = vrot.lane.b32.xlu0 %v179, 16
    %v229 = vpop.permute.xlu0 %228
    %230 = vrot.lane.b32.xlu0 %v180, 16
    %v231 = vpop.permute.xlu0 %230
    %vm232 = vcmp.lt.s32.totalorder %v67, 16
    %v233 = vsel %vm232, %v229, %v231
    %v234 = vsel %vm232, %v231, %v229
    %235 = vrot.lane.b32.xlu0 %v194, 16
    %v236 = vpop.permute.xlu0 %235
    %237 = vrot.lane.b32.xlu0 %v195, 16
    %v238 = vpop.permute.xlu0 %237
    %v239 = vsel %vm232, %v236, %v238
    %v240 = vsel %vm232, %v238, %v236
    %v241 = vstv %s47
    %v242 = vmul.f32 %v241, %v234
    %v243 = vmul.f32 %v241, %v233
    %v244 = vstv %s56
    %v245 = vmul.f32 %v244, %v240
    %v246 = vmul.f32 %v244, %v239
    %v247 = vadd.f32 %v242, %v245
    %v248 = vadd.f32 %v243, %v246
    %v249 = vsel %vm69, 1, 0
    %v250 = vsel %vm70, 1, 0
    %vm251 = vcmp.eq.s32.totalorder %v249, 1
    %vm252 = vcmp.eq.s32.totalorder %v250, 1
    %v253 = vsel %vm251, %v247, 0.0
    %v254 = vsel %vm252, %v248, 0.0
    %v255 = vadd.f32 %v226, %v253
    %v256 = vadd.f32 %v227, %v254
    %257 = vrot.lane.b32.xlu0 %v179, 15
    %v258 = vpop.permute.xlu0 %257
    %259 = vrot.lane.b32.xlu0 %v180, 15
    %v260 = vpop.permute.xlu0 %259
    %vm261 = vcmp.lt.s32.totalorder %v67, 15
    %v262 = vsel %vm261, %v258, %v260
    %v263 = vsel %vm261, %v260, %v258
    %264 = vrot.lane.b32.xlu0 %v194, 15
    %v265 = vpop.permute.xlu0 %264
    %266 = vrot.lane.b32.xlu0 %v195, 15
    %v267 = vpop.permute.xlu0 %266
    %v268 = vsel %vm261, %v265, %v267
    %v269 = vsel %vm261, %v267, %v265
    %v270 = vstv %s48
    %v271 = vmul.f32 %v270, %v263
    %v272 = vmul.f32 %v270, %v262
    %v273 = vstv %s57
    %v274 = vmul.f32 %v273, %v269
    %v275 = vmul.f32 %v273, %v268
    %v276 = vadd.f32 %v271, %v274
    %v277 = vadd.f32 %v272, %v275
    %v278 = vsel %vm97, 1, 0
    %v279 = vsel %vm98, 1, 0
    %v280 = vlaneseq
    %v281 = vshrl.u32 %v280, 7
    %v282 = vsub.s32 0, %v281
    %v283 = vrot.slane %v278, %v282
    %v284 = vlaneseq
    %v285 = vshrl.u32 %v284, 7
    %v286 = vsub.s32 0, %v285
    %v287 = vrot.slane %v279, %v286
    %vm288 = vcmp.eq.s32.totalorder %v283, 1
    %vm289 = vcmp.eq.s32.totalorder %v287, 1
    %v290 = vsel %vm288, %v276, 0.0
    %v291 = vsel %vm289, %v277, 0.0
    %v292 = vadd.f32 %v255, %v290
    %v293 = vadd.f32 %v256, %v291
    %294 = vrot.lane.b32.xlu0 %v179, 1
    %v295 = vpop.permute.xlu0 %294
    %296 = vrot.lane.b32.xlu0 %v180, 1
    %v297 = vpop.permute.xlu0 %296
    %vm298 = vcmp.lt.s32.totalorder %v67, 1
    %v299 = vsel %vm298, %v295, %v297
    %v300 = vsel %vm298, %v297, %v295
    %301 = vrot.lane.b32.xlu0 %v194, 1
    %v302 = vpop.permute.xlu0 %301
    %303 = vrot.lane.b32.xlu0 %v195, 1
    %v304 = vpop.permute.xlu0 %303
    %v305 = vsel %vm298, %v302, %v304
    %v306 = vsel %vm298, %v304, %v302
    %v307 = vstv %s49
    %v308 = vmul.f32 %v307, %v300
    %v309 = vmul.f32 %v307, %v299
    %v310 = vstv %s58
    %v311 = vmul.f32 %v310, %v306
    %v312 = vmul.f32 %v310, %v305
    %v313 = vadd.f32 %v308, %v311
    %v314 = vadd.f32 %v309, %v312
    %vm315 = vcmp.eq.s32.totalorder %v76, 1
    %vm316 = vcmp.eq.s32.totalorder %v80, 1
    %v317 = vsel %vm315, %v313, 0.0
    %v318 = vsel %vm316, %v314, 0.0
    %v319 = vadd.f32 %v292, %v317
    %v320 = vadd.f32 %v293, %v318
    %v321 = vstv %s50
    %v322 = vmul.f32 %v321, %v120
    %v323 = vmul.f32 %v321, %v127
    %v324 = vmul.f32 %v321, %v134
    %v325 = vmul.f32 %v321, %v141
    %v326 = vstv %s59
    %v327 = vmul.f32 %v326, %v170
    %v328 = vmul.f32 %v326, %v171
    %v329 = vmul.f32 %v326, %v172
    %v330 = vmul.f32 %v326, %v173
    %v331 = vadd.f32 %v322, %v327
    %v332 = vadd.f32 %v323, %v328
    %v333 = vadd.f32 %v324, %v329
    %v334 = vadd.f32 %v325, %v330
    %v339 = vsel %vm178, %v333, %v331
    %v340 = vsel %vm178, %v334, %v332
    %v343 = vadd.f32 %v319, %v339
    %v344 = vadd.f32 %v320, %v340
    %345 = vrot.lane.b32.xlu0 %v179, 127
    %v346 = vpop.permute.xlu0 %345
    %347 = vrot.lane.b32.xlu0 %v180, 127
    %v348 = vpop.permute.xlu0 %347
    %vm349 = vcmp.lt.s32.totalorder %v67, 127
    %v350 = vsel %vm349, %v346, %v348
    %v351 = vsel %vm349, %v348, %v346
    %352 = vrot.lane.b32.xlu0 %v194, 127
    %v353 = vpop.permute.xlu0 %352
    %354 = vrot.lane.b32.xlu0 %v195, 127
    %v355 = vpop.permute.xlu0 %354
    %v356 = vsel %vm349, %v353, %v355
    %v357 = vsel %vm349, %v355, %v353
    %v358 = vstv %s51
    %v359 = vmul.f32 %v358, %v350
    %v360 = vmul.f32 %v358, %v351
    %v361 = vstv %s60
    %v362 = vmul.f32 %v361, %v356
    %v363 = vmul.f32 %v361, %v357
    %v364 = vadd.f32 %v359, %v362
    %v365 = vadd.f32 %v360, %v363
    %vm366 = vcmp.eq.s32.totalorder %v90, 1
    %vm367 = vcmp.eq.s32.totalorder %v94, 1
    %v368 = vsel %vm366, %v364, 0.0
    %v369 = vsel %vm367, %v365, 0.0
    %v370 = vadd.f32 %v343, %v368
    %v371 = vadd.f32 %v344, %v369
    %372 = vrot.lane.b32.xlu0 %v179, 113
    %v373 = vpop.permute.xlu0 %372
    %374 = vrot.lane.b32.xlu0 %v180, 113
    %v375 = vpop.permute.xlu0 %374
    %vm376 = vcmp.lt.s32.totalorder %v67, 113
    %v377 = vsel %vm376, %v373, %v375
    %v378 = vsel %vm376, %v375, %v373
    %379 = vrot.lane.b32.xlu0 %v194, 113
    %v380 = vpop.permute.xlu0 %379
    %381 = vrot.lane.b32.xlu0 %v195, 113
    %v382 = vpop.permute.xlu0 %381
    %v383 = vsel %vm376, %v380, %v382
    %v384 = vsel %vm376, %v382, %v380
    %v385 = vstv %s52
    %v386 = vmul.f32 %v385, %v377
    %v387 = vmul.f32 %v385, %v378
    %v388 = vstv %s61
    %v389 = vmul.f32 %v388, %v383
    %v390 = vmul.f32 %v388, %v384
    %v391 = vadd.f32 %v386, %v389
    %v392 = vadd.f32 %v387, %v390
    %v393 = vsel %vm101, 1, 0
    %v394 = vsel %vm102, 1, 0
    %v395 = vlaneseq
    %v396 = vshrl.u32 %v395, 7
    %v397 = vsub.s32 0, %v396
    %v398 = vrot.slane %v393, %v397
    %v399 = vlaneseq
    %v400 = vshrl.u32 %v399, 7
    %v401 = vsub.s32 0, %v400
    %v402 = vrot.slane %v394, %v401
    %vm403 = vcmp.eq.s32.totalorder %v398, 1
    %vm404 = vcmp.eq.s32.totalorder %v402, 1
    %v405 = vsel %vm403, %v391, 0.0
    %v406 = vsel %vm404, %v392, 0.0
    %v407 = vadd.f32 %v370, %v405
    %v408 = vadd.f32 %v371, %v406
    %409 = vrot.lane.b32.xlu0 %v179, 112
    %v410 = vpop.permute.xlu0 %409
    %411 = vrot.lane.b32.xlu0 %v180, 112
    %v412 = vpop.permute.xlu0 %411
    %vm413 = vcmp.lt.s32.totalorder %v67, 112
    %v414 = vsel %vm413, %v410, %v412
    %v415 = vsel %vm413, %v412, %v410
    %416 = vrot.lane.b32.xlu0 %v194, 112
    %v417 = vpop.permute.xlu0 %416
    %418 = vrot.lane.b32.xlu0 %v195, 112
    %v419 = vpop.permute.xlu0 %418
    %v420 = vsel %vm413, %v417, %v419
    %v421 = vsel %vm413, %v419, %v417
    %v422 = vstv %s53
    %v423 = vmul.f32 %v422, %v414
    %v424 = vmul.f32 %v422, %v415
    %v425 = vstv %s62
    %v426 = vmul.f32 %v425, %v420
    %v427 = vmul.f32 %v425, %v421
    %v428 = vadd.f32 %v423, %v426
    %v429 = vadd.f32 %v424, %v427
    %v430 = vsel %vm99, 1, 0
    %v431 = vsel %vm100, 1, 0
    %vm432 = vcmp.eq.s32.totalorder %v430, 1
    %vm433 = vcmp.eq.s32.totalorder %v431, 1
    %v434 = vsel %vm432, %v428, 0.0
    %v435 = vsel %vm433, %v429, 0.0
    %v436 = vadd.f32 %v407, %v434
    %v437 = vadd.f32 %v408, %v435
    %438 = vrot.lane.b32.xlu0 %v179, 111
    %v439 = vpop.permute.xlu0 %438
    %440 = vrot.lane.b32.xlu0 %v180, 111
    %v441 = vpop.permute.xlu0 %440
    %vm442 = vcmp.lt.s32.totalorder %v67, 111
    %v443 = vsel %vm442, %v439, %v441
    %v444 = vsel %vm442, %v441, %v439
    %445 = vrot.lane.b32.xlu0 %v194, 111
    %v446 = vpop.permute.xlu0 %445
    %447 = vrot.lane.b32.xlu0 %v195, 111
    %v448 = vpop.permute.xlu0 %447
    %v449 = vsel %vm442, %v446, %v448
    %v450 = vsel %vm442, %v448, %v446
    %v451 = vstv %s54
    %v452 = vmul.f32 %v451, %v443
    %v453 = vmul.f32 %v451, %v444
    %v454 = vstv %s63
    %v455 = vmul.f32 %v454, %v449
    %v456 = vmul.f32 %v454, %v450
    %v457 = vadd.f32 %v452, %v455
    %v458 = vadd.f32 %v453, %v456
    %v459 = vsel %vm103, 1, 0
    %v460 = vsel %vm104, 1, 0
    %v461 = vlaneseq
    %v462 = vshrl.u32 %v461, 7
    %v463 = vsub.s32 0, %v462
    %v464 = vrot.slane %v459, %v463
    %v465 = vlaneseq
    %v466 = vshrl.u32 %v465, 7
    %v467 = vsub.s32 0, %v466
    %v468 = vrot.slane %v460, %v467
    %vm469 = vcmp.eq.s32.totalorder %v464, 1
    %vm470 = vcmp.eq.s32.totalorder %v468, 1
    %v471 = vsel %vm469, %v457, 0.0
    %v472 = vsel %vm470, %v458, 0.0
    %v473 = vadd.f32 %v436, %v471
    %v474 = vadd.f32 %v437, %v472
    %v475 = vstv %s64
    %v476 = vadd.f32 %v473, %v475
    %v477 = vadd.f32 %v474, %v475
    %v478 = vxor.u32 %v476, 2147483648
    %v479 = vxor.u32 %v477, 2147483648
    %v480 = vmul.f32 %v478, 1.442695
    %v481 = vpow.pop %v480
    %v482 = vmul.f32 %v479, 1.442695
    %v483 = vpow.pop %v482
    %v484 = vadd.f32 %v481, 1.0
    %v485 = vadd.f32 %v483, 1.0
    %v486 = vrcp.pop %v484
    %v487 = vmul.f32 1.0, %v486
    %v488 = vrcp.pop %v485
    %v489 = vmul.f32 1.0, %v488
    %v490 = vld [vmem:[#allocation7] sm:$0xff]
    %v491 = vlaneseq
    %v492 = vshrl.u32 %v491, 7
    %v493 = vsub.s32 0, %v492
    %v494 = vrot.slane %v487, %v493
    %v495 = vlaneseq
    %v496 = vshrl.u32 %v495, 7
    %v497 = vsub.s32 0, %v496
    %v498 = vrot.slane %v489, %v497
    %v501 = vcombine.low %v494, %v498
    %v503 = vmul.f32 %v490, %v501
    %504 = vst [vmem:[#allocation8] sm:$0xff] %v503
    %s505 = scalar_lea.vmem [#allocation7], 8
    %v506 = vld [vmem:[%s505] sm:$0xff]
    %v507 = vlaneseq
    %v508 = vshrl.u32 %v507, 7
    %v509 = vsub.s32 1, %v508
    %v510 = vrot.slane %v487, %v509
    %v511 = vlaneseq
    %v512 = vshrl.u32 %v511, 7
    %v513 = vsub.s32 1, %v512
    %v514 = vrot.slane %v489, %v513
    %v517 = vcombine.low %v510, %v514
    %v519 = vmul.f32 %v506, %v517
    %s520 = scalar_lea.vmem [#allocation8], 8
    %521 = vst [vmem:[%s520] sm:$0xff] %v519
    // Predicated region
    $region26: #{tpu_custom_call.1} parent=1 // pred_check
      _
    $region27: #{tpu_custom_call.1} parent=1 // pred_check_branch
      %523 = sbr.rel (0) target = $region29
    $region28: #{tpu_custom_call.1} parent=1 // pred_region
      %s525 = ssub.s32 256, 256
      %526 = vsyncadd [#allocation5], %s525
      %s527 = sshll.u32 [#allocation8], 4
      %s528 = int_to_ptr.vmem [resolvable:$true] %s527
      %533 = dma.vmem_to_hbm [thread:$0]  %s528, 256, %s4, [#allocation5], 128, 128, 8
    $region29: #{tpu_custom_call.1} parent=1 // pred_fallthru
      _
    // Predicated region
    $region30: #{tpu_custom_call.1} parent=1 // pred_check
      _
    $region31: #{tpu_custom_call.1} parent=1 // pred_check_branch
      %535 = sbr.rel (0) target = $region33
    $region32: #{tpu_custom_call.1} parent=1 // pred_region
      %536 = dma.done [#allocation5], 256
    $region33: #{tpu_custom_call.1} parent=1 // pred_fallthru
      _
    %537 = vsyncpa [#allocation4], 1
    %538 = vsyncpa [#allocation5], 1
    %539 = vsyncpa [#allocation6], 1

</llo_original>
